<compile_context>
chip_gen: v7x
topology: tpu7x:2x2x1
jax: 0.10.0
libtpu: 0.0.40
codegen_flags: <defaults>
</compile_context>

<pallas_src>
import functools

import jax
import jax.numpy as jnp
from jax import lax
from jax.experimental import pallas as pl
from jax.experimental.pallas import tpu as pltpu

_LANE = 128


def _round_up(x, m):
    return (x + m - 1) // m * m


def _mlp_kernel(x_ref, *refs, n_linear, mxu_dtype):
    """Fused MLP: natural-layout I/O tiles, lane-dense internal chain.

    x_ref:   (block_batch, input_dim)        natural row-major batch
    refs:    (w0, b0, ..., w_{L-1}, b_{L-1}, out_ref)
             w_i : (out_i, in_i)  torch nn.Linear layout
             b_i : (out_i, 1) f32 for i < L-1, (1, out_dims) f32 for i = L-1
    out_ref: (block_batch, out_dims)         natural layout (no wrapper .T)

    All matmuls accumulate in f32; bias add / ReLU stay f32.  Intermediates
    are (feat, block_batch) so VPU work and stores are lane-dense; the
    layout flips happen inside the first/last MXU contractions and ride the
    otherwise-idle XLU slot.
    """
    out_ref = refs[-1]
    params = refs[:-1]

    x = x_ref[...]

    # ---- layer 0: contract x's feature axis with w0's `in` axis so the
    # result is already lane-dense: (hidden, block_batch).
    w0 = params[0][...].astype(mxu_dtype)
    b0 = params[1][...]                                    # (hidden, 1) f32
    h = lax.dot_general(w0, x.astype(mxu_dtype),
                        dimension_numbers=(((1,), (1,)), ((), ())),
                        preferred_element_type=jnp.float32)
    h = jnp.maximum(h + b0, 0.0)

    # ---- hidden layers: plain lane-dense chain (feat, block_batch).
    for i in range(1, n_linear - 1):
        w = params[2 * i][...].astype(mxu_dtype)
        b = params[2 * i + 1][...]                         # (feat, 1) f32
        h = jnp.dot(w, h.astype(mxu_dtype),
                    preferred_element_type=jnp.float32)
        h = jnp.maximum(h + b, 0.0)

    # ---- final projection: contract h's feature axis (dim 0) with w_last's
    # `in` axis so the result comes out batch-major (block_batch, out_dims)
    # and is written straight to the natural-layout output block.
    w_l = params[2 * (n_linear - 1)][...].astype(mxu_dtype)
    b_l = params[2 * (n_linear - 1) + 1][...]              # (1, out_dims) f32
    out = lax.dot_general(h.astype(mxu_dtype), w_l,
                          dimension_numbers=(((0,), (1,)), ((), ())),
                          preferred_element_type=jnp.float32)
    out_ref[...] = (out + b_l).astype(out_ref.dtype)


def mlp_forward(x, weights, biases, *, block_batch=None, bf16_matmul=False,
                interpret=False):
    """Run the fused MLP Pallas kernel.

    x:       (B, input_dim)
    weights: list of (out_i, in_i) arrays  (PyTorch nn.Linear layout)
    biases:  list of (out_i,) arrays
    bf16_matmul: cast MXU operands to bf16 (f32 accumulation) even when the
                 storage dtype is f32 -- single-pass MXU on v5e/v6e.
    Returns (B, out_dims) in x.dtype (torch semantics).
    """
    B, input_dim = x.shape
    n_linear = len(weights)
    assert n_linear == len(biases) and n_linear >= 2
    out_dims = weights[-1].shape[0]
    dtype = x.dtype
    bytes_el = jnp.dtype(dtype).itemsize
    mxu_dtype = jnp.bfloat16 if bf16_matmul else dtype

    # ---- batch tiling.  Large tiles amortize the ~0.35 us per-grid-step
    # overhead; capping at ceil(B/4) rows keeps grid >= 4 once B is large
    # enough (both v7x TensorCores busy, double-buffering alive) and bounds
    # zero-padding waste.  block_batch is a multiple of 128 so the internal
    # (feat, block_batch) activations are lane-dense.
    if block_batch is None:
        block_batch = min(8192, _round_up(pl.cdiv(B, 4), _LANE))
    block_batch = max(_LANE, _round_up(int(block_batch), _LANE))
    B_pad = _round_up(B, block_batch)
    grid = (B_pad // block_batch,)

    # Natural (B, input_dim) layout -- no wrapper-side transpose of x.  Pad
    # (one cheap copy) only when B does not divide the tile; padded rows stay
    # in their own columns inside the kernel and are sliced off the output.
    if B_pad != B:
        x = jnp.pad(x, ((0, B_pad - B), (0, 0)))

    w2d = [w.astype(dtype) for w in weights]
    b2d = []
    for i, b in enumerate(biases):
        # Biases stay f32 regardless of storage dtype (negligible bytes).
        bf = b.astype(jnp.float32)
        b2d.append(bf.reshape(1, -1) if i == n_linear - 1 else bf.reshape(-1, 1))

    in_specs = [pl.BlockSpec((block_batch, input_dim), lambda i: (i, 0))]
    flat_params = []
    for w, b in zip(w2d, b2d):
        # Tiny, fully resident blocks (constant index map -> fetched once).
        in_specs.append(pl.BlockSpec(w.shape, lambda i: (0, 0)))
        in_specs.append(pl.BlockSpec(b.shape, lambda i: (0, 0)))
        flat_params += [w, b]

    out_spec = pl.BlockSpec((block_batch, out_dims), lambda i: (i, 0))

    # ---- VMEM budget: double-buffered x/out tiles + resident params + live
    # f32 activation slabs, +25% headroom, capped at 48 MiB so it stays well
    # inside v7x's 64 MiB per-TensorCore VMEM.
    max_feat = max(w.shape[0] for w in w2d)
    param_bytes = (sum(w.size for w in w2d) * bytes_el
                   + sum(b.size for b in b2d) * 4)
    est = (2 * block_batch * input_dim * bytes_el     # double-buffered x tiles
           + 2 * block_batch * out_dims * bytes_el    # double-buffered out tiles
           + 2 * param_bytes                          # resident params
           + 2 * block_batch * max_feat * 4)          # live f32 activations
    vmem_limit = int(min(48 * 1024 * 1024,
                         max(int(est * 1.25), 16 * 1024 * 1024)))

    kernel = functools.partial(_mlp_kernel, n_linear=n_linear,
                               mxu_dtype=mxu_dtype)

    out = pl.pallas_call(
        kernel,
        out_shape=jax.ShapeDtypeStruct((B_pad, out_dims), dtype),
        grid_spec=pl.GridSpec(grid=grid, in_specs=in_specs, out_specs=out_spec),
        compiler_params=pltpu.CompilerParams(
            dimension_semantics=("parallel",),
            vmem_limit_bytes=vmem_limit,
        ),
        interpret=interpret,
    )(x, *flat_params)

    return out[:B] if B_pad != B else out


def init_mlp_params(key, input_dim, dim_hidden, num_layers, out_dims):
    """PyTorch-like uniform(+-1/sqrt(fan_in)) init, torch (out, in) layout."""
    dims = [input_dim, dim_hidden] + [dim_hidden] * num_layers + [out_dims]
    weights, biases = [], []
    for i in range(len(dims) - 1):
        fan_in, fan_out = dims[i], dims[i + 1]
        key, kw, kb = jax.random.split(key, 3)
        bound = 1.0 / (fan_in ** 0.5)
        w = jax.random.uniform(kw, (fan_out, fan_in), jnp.float32, -bound, bound)
        b = jax.random.uniform(kb, (fan_out,), jnp.float32, -bound, bound)
        weights.append(w)
        biases.append(b)
    return weights, biases


def mlp_reference(x, weights, biases):
    """Pure-JAX reference (torch semantics: y = x @ W.T + b)."""
    h = x
    n = len(weights)
    for i, (w, b) in enumerate(zip(weights, biases)):
        h = h @ w.T + b
        if i < n - 1:
            h = jnp.maximum(h, 0.0)
    return h


if __name__ == "__main__":
    # MLP(input_dim=4, dim_hidden=32, num_layers=2, out_dims=16), batch of 8.
    input_dim, dim_hidden, num_layers, out_dims = 4, 32, 2, 16
    batch = 8

    key = jax.random.PRNGKey(0)
    key, kx = jax.random.split(key)
    x = jax.random.normal(kx, (batch, input_dim), jnp.float32)
    weights, biases = init_mlp_params(key, input_dim, dim_hidden,
                                      num_layers, out_dims)

    ref = mlp_reference(x, weights, biases)

    # f32 storage path: tight correctness check.
    out = jax.block_until_ready(mlp_forward(x, weights, biases))
    assert out.shape == (batch, out_dims)
    assert jnp.allclose(out, ref, atol=1e-5, rtol=1e-5), "f32 mismatch vs reference"

    # bf16 storage path (recommended on v5e: halves HBM traffic): loose check.
    x_bf = x.astype(jnp.bfloat16)
    w_bf = [w.astype(jnp.bfloat16) for w in weights]
    out_bf = jax.block_until_ready(mlp_forward(x_bf, w_bf, biases))
    assert out_bf.shape == (batch, out_dims)
    assert jnp.allclose(out_bf.astype(jnp.float32), ref, atol=1e-1, rtol=1e-1), \
        "bf16 storage mismatch vs reference"

    # f32 storage with bf16 MXU operands (single-pass MXU on v5e/v6e): loose.
    out_mx = jax.block_until_ready(mlp_forward(x, weights, biases,
                                               bf16_matmul=True))
    assert out_mx.shape == (batch, out_dims)
    assert jnp.allclose(out_mx, ref, atol=1e-1, rtol=1e-1), \
        "bf16-MXU mismatch vs reference"

    print("KERNEL_OK")
</pallas_src>

<mosaic_0001>
module attributes {stable_mosaic.version = 11 : i64} {
  func.func @_mlp_kernel(%arg0: i32, %arg1: memref<128x4xf32, #tpu.memory_space<vmem>>, %arg2: memref<32x4xf32, #tpu.memory_space<vmem>>, %arg3: memref<32x1xf32, #tpu.memory_space<vmem>>, %arg4: memref<32x32xf32, #tpu.memory_space<vmem>>, %arg5: memref<32x1xf32, #tpu.memory_space<vmem>>, %arg6: memref<32x32xf32, #tpu.memory_space<vmem>>, %arg7: memref<32x1xf32, #tpu.memory_space<vmem>>, %arg8: memref<16x32xf32, #tpu.memory_space<vmem>>, %arg9: memref<1x16xf32, #tpu.memory_space<vmem>>, %arg10: memref<128x16xf32, #tpu.memory_space<vmem>>) attributes {dimension_semantics = [#tpu.dimension_semantics<parallel>], iteration_bounds = array<i64: 1>, scalar_prefetch = 0 : i64, scratch_operands = 0 : i64, tpu.core_type = #tpu.core_type<tc>, window_params = [{transform_indices = @transform_0, window_bounds = array<i64: 128, 4>}, {pipeline_mode = #tpu.pipeline_mode<synchronous>, transform_indices = @transform_1, window_bounds = array<i64: 32, 4>}, {pipeline_mode = #tpu.pipeline_mode<synchronous>, transform_indices = @transform_2, window_bounds = array<i64: 32, 1>}, {pipeline_mode = #tpu.pipeline_mode<synchronous>, transform_indices = @transform_3, window_bounds = array<i64: 32, 32>}, {pipeline_mode = #tpu.pipeline_mode<synchronous>, transform_indices = @transform_4, window_bounds = array<i64: 32, 1>}, {pipeline_mode = #tpu.pipeline_mode<synchronous>, transform_indices = @transform_5, window_bounds = array<i64: 32, 32>}, {pipeline_mode = #tpu.pipeline_mode<synchronous>, transform_indices = @transform_6, window_bounds = array<i64: 32, 1>}, {pipeline_mode = #tpu.pipeline_mode<synchronous>, transform_indices = @transform_7, window_bounds = array<i64: 16, 32>}, {pipeline_mode = #tpu.pipeline_mode<synchronous>, transform_indices = @transform_8, window_bounds = array<i64: 1, 16>}, {transform_indices = @transform_9, window_bounds = array<i64: 128, 16>}]} {
    %c0 = arith.constant 0 : index
    %c0_0 = arith.constant 0 : index
    %0 = vector.load %arg1[%c0, %c0_0] : memref<128x4xf32, #tpu.memory_space<vmem>>, vector<128x4xf32>
    %c0_1 = arith.constant 0 : index
    %c0_2 = arith.constant 0 : index
    %1 = vector.load %arg2[%c0_1, %c0_2] : memref<32x4xf32, #tpu.memory_space<vmem>>, vector<32x4xf32>
    %c0_3 = arith.constant 0 : index
    %c0_4 = arith.constant 0 : index
    %2 = vector.load %arg3[%c0_3, %c0_4] : memref<32x1xf32, #tpu.memory_space<vmem>>, vector<32x1xf32>
    %cst = arith.constant dense<0.000000e+00> : vector<32x128xf32>
    %3 = tpu.matmul %1, %0, %cst {dimension_numbers = #tpu.dot_dimension_numbers<[1], [1], [0], [0], [0, 0, 1, 0], [], []>} : vector<32x4xf32>, vector<128x4xf32>, vector<32x128xf32> -> vector<32x128xf32>
    %4 = vector.broadcast %2 : vector<32x1xf32> to vector<32x128xf32>
    %5 = arith.addf %3, %4 : vector<32x128xf32>
    %cst_5 = arith.constant 0.000000e+00 : f32
    %6 = vector.broadcast %cst_5 : f32 to vector<32x128xf32>
    %7 = arith.maximumf %5, %6 : vector<32x128xf32>
    %c0_6 = arith.constant 0 : index
    %c0_7 = arith.constant 0 : index
    %8 = vector.load %arg4[%c0_6, %c0_7] : memref<32x32xf32, #tpu.memory_space<vmem>>, vector<32x32xf32>
    %c0_8 = arith.constant 0 : index
    %c0_9 = arith.constant 0 : index
    %9 = vector.load %arg5[%c0_8, %c0_9] : memref<32x1xf32, #tpu.memory_space<vmem>>, vector<32x1xf32>
    %cst_10 = arith.constant dense<0.000000e+00> : vector<32x128xf32>
    %10 = tpu.matmul %8, %7, %cst_10 {dimension_numbers = #tpu.dot_dimension_numbers<[1], [0], [0], [1], [0, 0, 1, 1], [], []>} : vector<32x32xf32>, vector<32x128xf32>, vector<32x128xf32> -> vector<32x128xf32>
    %11 = vector.broadcast %9 : vector<32x1xf32> to vector<32x128xf32>
    %12 = arith.addf %10, %11 : vector<32x128xf32>
    %cst_11 = arith.constant 0.000000e+00 : f32
    %13 = vector.broadcast %cst_11 : f32 to vector<32x128xf32>
    %14 = arith.maximumf %12, %13 : vector<32x128xf32>
    %c0_12 = arith.constant 0 : index
    %c0_13 = arith.constant 0 : index
    %15 = vector.load %arg6[%c0_12, %c0_13] : memref<32x32xf32, #tpu.memory_space<vmem>>, vector<32x32xf32>
    %c0_14 = arith.constant 0 : index
    %c0_15 = arith.constant 0 : index
    %16 = vector.load %arg7[%c0_14, %c0_15] : memref<32x1xf32, #tpu.memory_space<vmem>>, vector<32x1xf32>
    %cst_16 = arith.constant dense<0.000000e+00> : vector<32x128xf32>
    %17 = tpu.matmul %15, %14, %cst_16 {dimension_numbers = #tpu.dot_dimension_numbers<[1], [0], [0], [1], [0, 0, 1, 1], [], []>} : vector<32x32xf32>, vector<32x128xf32>, vector<32x128xf32> -> vector<32x128xf32>
    %18 = vector.broadcast %16 : vector<32x1xf32> to vector<32x128xf32>
    %19 = arith.addf %17, %18 : vector<32x128xf32>
    %cst_17 = arith.constant 0.000000e+00 : f32
    %20 = vector.broadcast %cst_17 : f32 to vector<32x128xf32>
    %21 = arith.maximumf %19, %20 : vector<32x128xf32>
    %c0_18 = arith.constant 0 : index
    %c0_19 = arith.constant 0 : index
    %22 = vector.load %arg8[%c0_18, %c0_19] : memref<16x32xf32, #tpu.memory_space<vmem>>, vector<16x32xf32>
    %c0_20 = arith.constant 0 : index
    %c0_21 = arith.constant 0 : index
    %23 = vector.load %arg9[%c0_20, %c0_21] : memref<1x16xf32, #tpu.memory_space<vmem>>, vector<1x16xf32>
    %cst_22 = arith.constant dense<0.000000e+00> : vector<128x16xf32>
    %24 = tpu.matmul %21, %22, %cst_22 {dimension_numbers = #tpu.dot_dimension_numbers<[0], [1], [1], [0], [0, 1, 1, 0], [], []>} : vector<32x128xf32>, vector<16x32xf32>, vector<128x16xf32> -> vector<128x16xf32>
    %25 = vector.broadcast %23 : vector<1x16xf32> to vector<128x16xf32>
    %26 = arith.addf %24, %25 : vector<128x16xf32>
    %c0_23 = arith.constant 0 : index
    %c0_24 = arith.constant 0 : index
    %27 = vector.load %arg10[%c0_23, %c0_24] : memref<128x16xf32, #tpu.memory_space<vmem>>, vector<128x16xf32>
    tpu.vector_store %arg10[%c0_23, %c0_24], %26 {strides = array<i32>} : memref<128x16xf32, #tpu.memory_space<vmem>>, vector<128x16xf32>,
    return
  }
  func.func @transform_0(%arg0: i32) -> (i32, i32) {
    %c0_i32 = arith.constant 0 : i32
    %c0_i32_0 = arith.constant 0 : i32
    return %arg0, %c0_i32 : i32, i32
  }
  func.func @transform_1(%arg0: i32) -> (i32, i32) {
    %c0_i32 = arith.constant 0 : i32
    %c0_i32_0 = arith.constant 0 : i32
    %c0_i32_1 = arith.constant 0 : i32
    return %c0_i32, %c0_i32_0 : i32, i32
  }
  func.func @transform_2(%arg0: i32) -> (i32, i32) {
    %c0_i32 = arith.constant 0 : i32
    %c0_i32_0 = arith.constant 0 : i32
    %c0_i32_1 = arith.constant 0 : i32
    return %c0_i32, %c0_i32_0 : i32, i32
  }
  func.func @transform_3(%arg0: i32) -> (i32, i32) {
    %c0_i32 = arith.constant 0 : i32
    %c0_i32_0 = arith.constant 0 : i32
    %c0_i32_1 = arith.constant 0 : i32
    return %c0_i32, %c0_i32_0 : i32, i32
  }
  func.func @transform_4(%arg0: i32) -> (i32, i32) {
    %c0_i32 = arith.constant 0 : i32
    %c0_i32_0 = arith.constant 0 : i32
    %c0_i32_1 = arith.constant 0 : i32
    return %c0_i32, %c0_i32_0 : i32, i32
  }
  func.func @transform_5(%arg0: i32) -> (i32, i32) {
    %c0_i32 = arith.constant 0 : i32
    %c0_i32_0 = arith.constant 0 : i32
    %c0_i32_1 = arith.constant 0 : i32
    return %c0_i32, %c0_i32_0 : i32, i32
  }
  func.func @transform_6(%arg0: i32) -> (i32, i32) {
    %c0_i32 = arith.constant 0 : i32
    %c0_i32_0 = arith.constant 0 : i32
    %c0_i32_1 = arith.constant 0 : i32
    return %c0_i32, %c0_i32_0 : i32, i32
  }
  func.func @transform_7(%arg0: i32) -> (i32, i32) {
    %c0_i32 = arith.constant 0 : i32
    %c0_i32_0 = arith.constant 0 : i32
    %c0_i32_1 = arith.constant 0 : i32
    return %c0_i32, %c0_i32_0 : i32, i32
  }
  func.func @transform_8(%arg0: i32) -> (i32, i32) {
    %c0_i32 = arith.constant 0 : i32
    %c0_i32_0 = arith.constant 0 : i32
    %c0_i32_1 = arith.constant 0 : i32
    return %c0_i32, %c0_i32_0 : i32, i32
  }
  func.func @transform_9(%arg0: i32) -> (i32, i32) {
    %c0_i32 = arith.constant 0 : i32
    %c0_i32_0 = arith.constant 0 : i32
    return %arg0, %c0_i32 : i32, i32
  }
}

</mosaic_0001>

<llo_original>
// kernel: tpu_custom_call.1
$region0: #{tpu_custom_call.1}
  #allocation0 [shape = 'u32[]', space=smem, size = 0x4, offset = 0x4, fixed_abs, tag = 'smem constant byte address 0x4 - core index']
  #allocation1 [shape = 'u32[144,128]{1,0:T(1,128)}', space=vmem, size = 0x12000, scoped, tag = 'internal scratch']
  %s0 = inlined_call_operand.vmem [shape: f32[128,4], index: 0, kind: input, shape index: {}]
  %s1 = inlined_call_operand.vmem [shape: f32[32,4], index: 1, kind: input, shape index: {}]
  %s2 = inlined_call_operand.vmem [shape: f32[32,1], index: 2, kind: input, shape index: {}]
  %s3 = inlined_call_operand.vmem [shape: f32[32,32], index: 3, kind: input, shape index: {}]
  %s4 = inlined_call_operand.vmem [shape: f32[32,1], index: 4, kind: input, shape index: {}]
  %s5 = inlined_call_operand.vmem [shape: f32[32,32], index: 5, kind: input, shape index: {}]
  %s6 = inlined_call_operand.vmem [shape: f32[32,1], index: 6, kind: input, shape index: {}]
  %s7 = inlined_call_operand.vmem [shape: f32[16,32], index: 7, kind: input, shape index: {}]
  %s8 = inlined_call_operand.vmem [shape: f32[1,16], index: 8, kind: input, shape index: {}]
  %s9 = inlined_call_operand.vmem [shape: f32[128,16], index: 9, kind: output, shape index: {}]
  %s10 = sld [smem:[#allocation0]]
  $region46: #{tpu_custom_call.1} parent=0
    _
  %s12 = ssub.s32 1, %s10
  %s13 = scalar_select 0, %s12, %s10
  // Predicated region
  $region2: #{tpu_custom_call.1} parent=0 // pred_check
    _
  $region3: #{tpu_custom_call.1} parent=0 // pred_check_branch
    %15 = sbr.rel (0) target = $region5
  $region4: #{tpu_custom_call.1} parent=0 // pred_region
    _
  $region5: #{tpu_custom_call.1} parent=0 // pred_fallthru
    _
  // Predicated region
  $region6: #{tpu_custom_call.1} parent=0 // pred_check
    _
  $region7: #{tpu_custom_call.1} parent=0 // pred_check_branch
    %17 = sbr.rel (0) target = $region9
  $region8: #{tpu_custom_call.1} parent=0 // pred_region
    _
  $region9: #{tpu_custom_call.1} parent=0 // pred_fallthru
    _
  // Predicated region
  $region10: #{tpu_custom_call.1} parent=0 // pred_check
    _
  $region11: #{tpu_custom_call.1} parent=0 // pred_check_branch
    %19 = sbr.rel (0) target = $region13
  $region12: #{tpu_custom_call.1} parent=0 // pred_region
    _
  $region13: #{tpu_custom_call.1} parent=0 // pred_fallthru
    _
  // Predicated region
  $region14: #{tpu_custom_call.1} parent=0 // pred_check
    _
  $region15: #{tpu_custom_call.1} parent=0 // pred_check_branch
    %21 = sbr.rel (0) target = $region17
  $region16: #{tpu_custom_call.1} parent=0 // pred_region
    _
  $region17: #{tpu_custom_call.1} parent=0 // pred_fallthru
    _
  // Predicated region
  $region18: #{tpu_custom_call.1} parent=0 // pred_check
    _
  $region19: #{tpu_custom_call.1} parent=0 // pred_check_branch
    %23 = sbr.rel (0) target = $region21
  $region20: #{tpu_custom_call.1} parent=0 // pred_region
    _
  $region21: #{tpu_custom_call.1} parent=0 // pred_fallthru
    _
  // Predicated region
  $region22: #{tpu_custom_call.1} parent=0 // pred_check
    _
  $region23: #{tpu_custom_call.1} parent=0 // pred_check_branch
    %25 = sbr.rel (0) target = $region25
  $region24: #{tpu_custom_call.1} parent=0 // pred_region
    _
  $region25: #{tpu_custom_call.1} parent=0 // pred_fallthru
    _
  // Predicated region
  $region26: #{tpu_custom_call.1} parent=0 // pred_check
    _
  $region27: #{tpu_custom_call.1} parent=0 // pred_check_branch
    %27 = sbr.rel (0) target = $region29
  $region28: #{tpu_custom_call.1} parent=0 // pred_region
    _
  $region29: #{tpu_custom_call.1} parent=0 // pred_fallthru
    _
  // Predicated region
  $region30: #{tpu_custom_call.1} parent=0 // pred_check
    _
  $region31: #{tpu_custom_call.1} parent=0 // pred_check_branch
    %29 = sbr.rel (0) target = $region33
  $region32: #{tpu_custom_call.1} parent=0 // pred_region
    _
  $region33: #{tpu_custom_call.1} parent=0 // pred_fallthru
    _
  // Predicated region
  $region34: #{tpu_custom_call.1} parent=0 // pred_check
    _
  $region35: #{tpu_custom_call.1} parent=0 // pred_check_branch
    %31 = sbr.rel (0) target = $region37
  $region36: #{tpu_custom_call.1} parent=0 // pred_region
    _
  $region37: #{tpu_custom_call.1} parent=0 // pred_fallthru
    _
  %v32 = vld [vmem:[%s0] sm:$0xff]
  %v33 = vld [vmem:[%s0 + $0x8] sm:$0xff]
  %v34 = vld [vmem:[%s0 + $0x10] sm:$0xff]
  %v35 = vld [vmem:[%s0 + $0x18] sm:$0xff]
  %v36 = vld [vmem:[%s0 + $0x20] sm:$0xff]
  %v37 = vld [vmem:[%s0 + $0x28] sm:$0xff]
  %v38 = vld [vmem:[%s0 + $0x30] sm:$0xff]
  %v39 = vld [vmem:[%s0 + $0x38] sm:$0xff]
  %v40 = vld [vmem:[%s0 + $0x40] sm:$0xff]
  %v41 = vld [vmem:[%s0 + $0x48] sm:$0xff]
  %v42 = vld [vmem:[%s0 + $0x50] sm:$0xff]
  %v43 = vld [vmem:[%s0 + $0x58] sm:$0xff]
  %v44 = vld [vmem:[%s0 + $0x60] sm:$0xff]
  %v45 = vld [vmem:[%s0 + $0x68] sm:$0xff]
  %v46 = vld [vmem:[%s0 + $0x70] sm:$0xff]
  %v47 = vld [vmem:[%s0 + $0x78] sm:$0xff]
  %v48 = vld [vmem:[%s1] sm:$0xff]
  %v49 = vld [vmem:[%s1 + $0x8] sm:$0xff]
  %v50 = vld [vmem:[%s1 + $0x10] sm:$0xff]
  %v51 = vld [vmem:[%s1 + $0x18] sm:$0xff]
  %v52 = vld [vmem:[%s2] sm:$0xff]
  %v53 = vld [vmem:[%s2 + $0x8] sm:$0xff]
  %v54 = vld [vmem:[%s2 + $0x10] sm:$0xff]
  %v55 = vld [vmem:[%s2 + $0x18] sm:$0xff]
  %57 = vset.pattern.permute.xlu0 0
  %58 = vperm.xlu0 %57, %v52
  %v59 = vpop.permute.xlu0 %58
  %62 = vset.pattern.permute.xlu0 0
  %63 = vperm.xlu0 %62, %v53
  %v64 = vpop.permute.xlu0 %63
  %67 = vset.pattern.permute.xlu0 0
  %68 = vperm.xlu0 %67, %v54
  %v69 = vpop.permute.xlu0 %68
  %72 = vset.pattern.permute.xlu0 0
  %73 = vperm.xlu0 %72, %v55
  %v74 = vpop.permute.xlu0 %73
  %vm76 = vcmask 31744
  %v78 = vsel %vm76, %v48, 0
  %v81 = vsel %vm76, %v49, 0
  %v84 = vsel %vm76, %v50, 0
  %v87 = vsel %vm76, %v51, 0
  %v90 = vsel %vm76, %v32, 0
  %v93 = vsel %vm76, %v33, 0
  %v96 = vsel %vm76, %v34, 0
  %v99 = vsel %vm76, %v35, 0
  %v102 = vsel %vm76, %v36, 0
  %v105 = vsel %vm76, %v37, 0
  %v108 = vsel %vm76, %v38, 0
  %v111 = vsel %vm76, %v39, 0
  %v114 = vsel %vm76, %v40, 0
  %v117 = vsel %vm76, %v41, 0
  %v120 = vsel %vm76, %v42, 0
  %v123 = vsel %vm76, %v43, 0
  %v126 = vsel %vm76, %v44, 0
  %v129 = vsel %vm76, %v45, 0
  %v132 = vsel %vm76, %v46, 0
  %v135 = vsel %vm76, %v47, 0
  %137 = vmatprep.subr.mxu0 0.0
  %138 = vmatpush1.xpose.msra.mxu0 %v90
  %139 = vmatprep.subr.mxu0 0.0
  %140 = vmatpush1.xpose.msra.mxu0 %v93
  %141 = vmatprep.subr.mxu0 0.0
  %142 = vmatpush1.xpose.msra.mxu0 %v96
  %143 = vmatprep.subr.mxu0 0.0
  %144 = vmatpush1.xpose.msra.mxu0 %v99
  %145 = vmatprep.subr.mxu0 0.0
  %146 = vmatpush1.xpose.msra.mxu0 %v102
  %147 = vmatprep.subr.mxu0 0.0
  %148 = vmatpush1.xpose.msra.mxu0 %v105
  %149 = vmatprep.subr.mxu0 0.0
  %150 = vmatpush1.xpose.msra.mxu0 %v108
  %151 = vmatprep.subr.mxu0 0.0
  %152 = vmatpush1.xpose.msra.mxu0 %v111
  %153 = vmatprep.subr.mxu0 0.0
  %154 = vmatpush1.xpose.msra.mxu0 %v114
  %155 = vmatprep.subr.mxu0 0.0
  %156 = vmatpush1.xpose.msra.mxu0 %v117
  %157 = vmatprep.subr.mxu0 0.0
  %158 = vmatpush1.xpose.msra.mxu0 %v120
  %159 = vmatprep.subr.mxu0 0.0
  %160 = vmatpush1.xpose.msra.mxu0 %v123
  %161 = vmatprep.subr.mxu0 0.0
  %162 = vmatpush1.xpose.msra.mxu0 %v126
  %163 = vmatprep.subr.mxu0 0.0
  %164 = vmatpush1.xpose.msra.mxu0 %v129
  %165 = vmatprep.subr.mxu0 0.0
  %166 = vmatpush1.xpose.msra.mxu0 %v132
  %167 = vmatprep.subr.mxu0 0.0
  %168 = vmatpush1.xpose.msra.mxu0 %v135
  %169 = vmatprep.subr.mxu0 0.0
  %170 = vmatpush1.xpose.msra.mxu0 0.0
  %171 = vmatprep.subr.mxu0 0.0
  %172 = vmatpush1.xpose.msra.mxu0 0.0
  %173 = vmatprep.subr.mxu0 0.0
  %174 = vmatpush1.xpose.msra.mxu0 0.0
  %175 = vmatprep.subr.mxu0 0.0
  %176 = vmatpush1.xpose.msra.mxu0 0.0
  %177 = vmatprep.subr.mxu0 0.0
  %178 = vmatpush1.xpose.msra.mxu0 0.0
  %179 = vmatprep.subr.mxu0 0.0
  %180 = vmatpush1.xpose.msra.mxu0 0.0
  %181 = vmatprep.subr.mxu0 0.0
  %182 = vmatpush1.xpose.msra.mxu0 0.0
  %183 = vmatprep.subr.mxu0 0.0
  %184 = vmatpush1.xpose.msra.mxu0 0.0
  %185 = vmatprep.subr.mxu0 0.0
  %186 = vmatpush1.xpose.msra.mxu0 0.0
  %187 = vmatprep.subr.mxu0 0.0
  %188 = vmatpush1.xpose.msra.mxu0 0.0
  %189 = vmatprep.subr.mxu0 0.0
  %190 = vmatpush1.xpose.msra.mxu0 0.0
  %191 = vmatprep.subr.mxu0 0.0
  %192 = vmatpush1.xpose.msra.mxu0 0.0
  %193 = vmatprep.subr.mxu0 0.0
  %194 = vmatpush1.xpose.msra.mxu0 0.0
  %195 = vmatprep.subr.mxu0 0.0
  %196 = vmatpush1.xpose.msra.mxu0 0.0
  %197 = vmatprep.subr.mxu0 0.0
  %198 = vmatpush1.xpose.msra.mxu0 0.0
  %199 = vmatprep.subr.mxu0 0.0
  %200 = vmatpush1.xpose.msra.mxu0 0.0
  %201 = vmatprep.mubr.f32.mxu0 0.0
  %202 = vmatmul.mubr.f32.gmra.mrb[0].mxu0 %v78
  %v203 = vpop.f32.mrb[0].mxu0
  %v204 = vadd.f32 %v59, %v203
  %v205 = vpop.f32.mrb[0].mxu0
  %206 = vmatprep.mubr.f32.mxu0 0.0
  %207 = vmatmul.mubr.f32.gmra.mrb[0].mxu0 %v81
  %v208 = vpop.f32.mrb[0].mxu0
  %v209 = vadd.f32 %v64, %v208
  %v210 = vpop.f32.mrb[0].mxu0
  %211 = vmatprep.mubr.f32.mxu0 0.0
  %212 = vmatmul.mubr.f32.gmra.mrb[0].mxu0 %v84
  %v213 = vpop.f32.mrb[0].mxu0
  %v214 = vadd.f32 %v69, %v213
  %v215 = vpop.f32.mrb[0].mxu0
  %216 = vmatprep.mubr.f32.mxu0 0.0
  %217 = vmatmul.mubr.f32.gmra.mrb[0].mxu0 %v87
  %v218 = vpop.f32.mrb[0].mxu0
  %v219 = vadd.f32 %v74, %v218
  %v220 = vpop.f32.mrb[0].mxu0
  %221 = vdwg.mxu0
  %v222 = vmax.f32 %v204, 0.0
  %v223 = vmax.f32 %v209, 0.0
  %v224 = vmax.f32 %v214, 0.0
  %v225 = vmax.f32 %v219, 0.0
  %v226 = vld [vmem:[%s3] sm:$0xff]
  %v227 = vld [vmem:[%s3 + $0x8] sm:$0xff]
  %v228 = vld [vmem:[%s3 + $0x10] sm:$0xff]
  %v229 = vld [vmem:[%s3 + $0x18] sm:$0xff]
  %v230 = vld [vmem:[%s4] sm:$0xff]
  %v231 = vld [vmem:[%s4 + $0x8] sm:$0xff]
  %v232 = vld [vmem:[%s4 + $0x10] sm:$0xff]
  %v233 = vld [vmem:[%s4 + $0x18] sm:$0xff]
  %235 = vset.pattern.permute.xlu0 0
  %236 = vperm.xlu0 %235, %v230
  %v237 = vpop.permute.xlu0 %236
  %240 = vset.pattern.permute.xlu0 0
  %241 = vperm.xlu0 %240, %v231
  %v242 = vpop.permute.xlu0 %241
  %245 = vset.pattern.permute.xlu0 0
  %246 = vperm.xlu0 %245, %v232
  %v247 = vpop.permute.xlu0 %246
  %250 = vset.pattern.permute.xlu0 0
  %251 = vperm.xlu0 %250, %v233
  %v252 = vpop.permute.xlu0 %251
  %vm254 = vcmask 261120
  %v256 = vsel %vm254, %v226, 0
  %v259 = vsel %vm254, %v227, 0
  %v262 = vsel %vm254, %v228, 0
  %v265 = vsel %vm254, %v229, 0
  %267 = vmatprep.subr.mxu0 0.0
  %268 = vmatpush1.msra.mxu0 %v222
  %269 = vmatprep.subr.mxu0 0.0
  %270 = vmatpush1.msra.mxu0 %v223
  %271 = vmatprep.subr.mxu0 0.0
  %272 = vmatpush1.msra.mxu0 %v224
  %273 = vmatprep.subr.mxu0 0.0
  %274 = vmatpush1.msra.mxu0 %v225
  %275 = vmatprep.subr.mxu0 0.0
  %276 = vmatpush1.msra.mxu0 0.0
  %277 = vmatprep.subr.mxu0 0.0
  %278 = vmatpush1.msra.mxu0 0.0
  %279 = vmatprep.subr.mxu0 0.0
  %280 = vmatpush1.msra.mxu0 0.0
  %281 = vmatprep.subr.mxu0 0.0
  %282 = vmatpush1.msra.mxu0 0.0
  %283 = vmatprep.subr.mxu0 0.0
  %284 = vmatpush1.msra.mxu0 0.0
  %285 = vmatprep.subr.mxu0 0.0
  %286 = vmatpush1.msra.mxu0 0.0
  %287 = vmatprep.subr.mxu0 0.0
  %288 = vmatpush1.msra.mxu0 0.0
  %289 = vmatprep.subr.mxu0 0.0
  %290 = vmatpush1.msra.mxu0 0.0
  %291 = vmatprep.subr.mxu0 0.0
  %292 = vmatpush1.msra.mxu0 0.0
  %293 = vmatprep.subr.mxu0 0.0
  %294 = vmatpush1.msra.mxu0 0.0
  %295 = vmatprep.subr.mxu0 0.0
  %296 = vmatpush1.msra.mxu0 0.0
  %297 = vmatprep.subr.mxu0 0.0
  %298 = vmatpush1.msra.mxu0 0.0
  %299 = vmatprep.subr.mxu0 0.0
  %300 = vmatpush1.msra.mxu0 0.0
  %301 = vmatprep.subr.mxu0 0.0
  %302 = vmatpush1.msra.mxu0 0.0
  %303 = vmatprep.subr.mxu0 0.0
  %304 = vmatpush1.msra.mxu0 0.0
  %305 = vmatprep.subr.mxu0 0.0
  %306 = vmatpush1.msra.mxu0 0.0
  %307 = vmatprep.subr.mxu0 0.0
  %308 = vmatpush1.msra.mxu0 0.0
  %309 = vmatprep.subr.mxu0 0.0
  %310 = vmatpush1.msra.mxu0 0.0
  %311 = vmatprep.subr.mxu0 0.0
  %312 = vmatpush1.msra.mxu0 0.0
  %313 = vmatprep.subr.mxu0 0.0
  %314 = vmatpush1.msra.mxu0 0.0
  %315 = vmatprep.subr.mxu0 0.0
  %316 = vmatpush1.msra.mxu0 0.0
  %317 = vmatprep.subr.mxu0 0.0
  %318 = vmatpush1.msra.mxu0 0.0
  %319 = vmatprep.subr.mxu0 0.0
  %320 = vmatpush1.msra.mxu0 0.0
  %321 = vmatprep.subr.mxu0 0.0
  %322 = vmatpush1.msra.mxu0 0.0
  %323 = vmatprep.subr.mxu0 0.0
  %324 = vmatpush1.msra.mxu0 0.0
  %325 = vmatprep.subr.mxu0 0.0
  %326 = vmatpush1.msra.mxu0 0.0
  %327 = vmatprep.subr.mxu0 0.0
  %328 = vmatpush1.msra.mxu0 0.0
  %329 = vmatprep.subr.mxu0 0.0
  %330 = vmatpush1.msra.mxu0 0.0
  %331 = vmatprep.mubr.f32.mxu0 0.0
  %332 = vmatmul.mubr.f32.gmra.mrb[0].mxu0 %v256
  %v333 = vpop.f32.mrb[0].mxu0
  %v334 = vadd.f32 %v237, %v333
  %v335 = vpop.f32.mrb[0].mxu0
  %336 = vmatprep.mubr.f32.mxu0 0.0
  %337 = vmatmul.mubr.f32.gmra.mrb[0].mxu0 %v259
  %v338 = vpop.f32.mrb[0].mxu0
  %v339 = vadd.f32 %v242, %v338
  %v340 = vpop.f32.mrb[0].mxu0
  %341 = vmatprep.mubr.f32.mxu0 0.0
  %342 = vmatmul.mubr.f32.gmra.mrb[0].mxu0 %v262
  %v343 = vpop.f32.mrb[0].mxu0
  %v344 = vadd.f32 %v247, %v343
  %v345 = vpop.f32.mrb[0].mxu0
  %346 = vmatprep.mubr.f32.mxu0 0.0
  %347 = vmatmul.mubr.f32.gmra.mrb[0].mxu0 %v265
  %v348 = vpop.f32.mrb[0].mxu0
  %v349 = vadd.f32 %v252, %v348
  %v350 = vpop.f32.mrb[0].mxu0
  %351 = vdwg.mxu0
  %v352 = vmax.f32 %v334, 0.0
  %v353 = vmax.f32 %v339, 0.0
  %v354 = vmax.f32 %v344, 0.0
  %v355 = vmax.f32 %v349, 0.0
  %v356 = vld [vmem:[%s5] sm:$0xff]
  %v357 = vld [vmem:[%s5 + $0x8] sm:$0xff]
  %v358 = vld [vmem:[%s5 + $0x10] sm:$0xff]
  %v359 = vld [vmem:[%s5 + $0x18] sm:$0xff]
  %v360 = vld [vmem:[%s6] sm:$0xff]
  %v361 = vld [vmem:[%s6 + $0x8] sm:$0xff]
  %v362 = vld [vmem:[%s6 + $0x10] sm:$0xff]
  %v363 = vld [vmem:[%s6 + $0x18] sm:$0xff]
  %365 = vset.pattern.permute.xlu0 0
  %366 = vperm.xlu0 %365, %v360
  %v367 = vpop.permute.xlu0 %366
  %370 = vset.pattern.permute.xlu0 0
  %371 = vperm.xlu0 %370, %v361
  %v372 = vpop.permute.xlu0 %371
  %375 = vset.pattern.permute.xlu0 0
  %376 = vperm.xlu0 %375, %v362
  %v377 = vpop.permute.xlu0 %376
  %380 = vset.pattern.permute.xlu0 0
  %381 = vperm.xlu0 %380, %v363
  %v382 = vpop.permute.xlu0 %381
  %v385 = vsel %vm254, %v356, 0
  %v388 = vsel %vm254, %v357, 0
  %v391 = vsel %vm254, %v358, 0
  %v394 = vsel %vm254, %v359, 0
  %396 = vmatprep.subr.mxu0 0.0
  %397 = vmatpush1.msra.mxu0 %v352
  %398 = vmatprep.subr.mxu0 0.0
  %399 = vmatpush1.msra.mxu0 %v353
  %400 = vmatprep.subr.mxu0 0.0
  %401 = vmatpush1.msra.mxu0 %v354
  %402 = vmatprep.subr.mxu0 0.0
  %403 = vmatpush1.msra.mxu0 %v355
  %404 = vmatprep.subr.mxu0 0.0
  %405 = vmatpush1.msra.mxu0 0.0
  %406 = vmatprep.subr.mxu0 0.0
  %407 = vmatpush1.msra.mxu0 0.0
  %408 = vmatprep.subr.mxu0 0.0
  %409 = vmatpush1.msra.mxu0 0.0
  %410 = vmatprep.subr.mxu0 0.0
  %411 = vmatpush1.msra.mxu0 0.0
  %412 = vmatprep.subr.mxu0 0.0
  %413 = vmatpush1.msra.mxu0 0.0
  %414 = vmatprep.subr.mxu0 0.0
  %415 = vmatpush1.msra.mxu0 0.0
  %416 = vmatprep.subr.mxu0 0.0
  %417 = vmatpush1.msra.mxu0 0.0
  %418 = vmatprep.subr.mxu0 0.0
  %419 = vmatpush1.msra.mxu0 0.0
  %420 = vmatprep.subr.mxu0 0.0
  %421 = vmatpush1.msra.mxu0 0.0
  %422 = vmatprep.subr.mxu0 0.0
  %423 = vmatpush1.msra.mxu0 0.0
  %424 = vmatprep.subr.mxu0 0.0
  %425 = vmatpush1.msra.mxu0 0.0
  %426 = vmatprep.subr.mxu0 0.0
  %427 = vmatpush1.msra.mxu0 0.0
  %428 = vmatprep.subr.mxu0 0.0
  %429 = vmatpush1.msra.mxu0 0.0
  %430 = vmatprep.subr.mxu0 0.0
  %431 = vmatpush1.msra.mxu0 0.0
  %432 = vmatprep.subr.mxu0 0.0
  %433 = vmatpush1.msra.mxu0 0.0
  %434 = vmatprep.subr.mxu0 0.0
  %435 = vmatpush1.msra.mxu0 0.0
  %436 = vmatprep.subr.mxu0 0.0
  %437 = vmatpush1.msra.mxu0 0.0
  %438 = vmatprep.subr.mxu0 0.0
  %439 = vmatpush1.msra.mxu0 0.0
  %440 = vmatprep.subr.mxu0 0.0
  %441 = vmatpush1.msra.mxu0 0.0
  %442 = vmatprep.subr.mxu0 0.0
  %443 = vmatpush1.msra.mxu0 0.0
  %444 = vmatprep.subr.mxu0 0.0
  %445 = vmatpush1.msra.mxu0 0.0
  %446 = vmatprep.subr.mxu0 0.0
  %447 = vmatpush1.msra.mxu0 0.0
  %448 = vmatprep.subr.mxu0 0.0
  %449 = vmatpush1.msra.mxu0 0.0
  %450 = vmatprep.subr.mxu0 0.0
  %451 = vmatpush1.msra.mxu0 0.0
  %452 = vmatprep.subr.mxu0 0.0
  %453 = vmatpush1.msra.mxu0 0.0
  %454 = vmatprep.subr.mxu0 0.0
  %455 = vmatpush1.msra.mxu0 0.0
  %456 = vmatprep.subr.mxu0 0.0
  %457 = vmatpush1.msra.mxu0 0.0
  %458 = vmatprep.subr.mxu0 0.0
  %459 = vmatpush1.msra.mxu0 0.0
  %460 = vmatprep.mubr.f32.mxu0 0.0
  %461 = vmatmul.mubr.f32.gmra.mrb[0].mxu0 %v385
  %v462 = vpop.f32.mrb[0].mxu0
  %v463 = vadd.f32 %v367, %v462
  %v464 = vpop.f32.mrb[0].mxu0
  %465 = vmatprep.mubr.f32.mxu0 0.0
  %466 = vmatmul.mubr.f32.gmra.mrb[0].mxu0 %v388
  %v467 = vpop.f32.mrb[0].mxu0
  %v468 = vadd.f32 %v372, %v467
  %v469 = vpop.f32.mrb[0].mxu0
  %470 = vmatprep.mubr.f32.mxu0 0.0
  %471 = vmatmul.mubr.f32.gmra.mrb[0].mxu0 %v391
  %v472 = vpop.f32.mrb[0].mxu0
  %v473 = vadd.f32 %v377, %v472
  %v474 = vpop.f32.mrb[0].mxu0
  %475 = vmatprep.mubr.f32.mxu0 0.0
  %476 = vmatmul.mubr.f32.gmra.mrb[0].mxu0 %v394
  %v477 = vpop.f32.mrb[0].mxu0
  %v478 = vadd.f32 %v382, %v477
  %v479 = vpop.f32.mrb[0].mxu0
  %480 = vdwg.mxu0
  %v481 = vmax.f32 %v463, 0.0
  %v482 = vmax.f32 %v468, 0.0
  %v483 = vmax.f32 %v473, 0.0
  %v484 = vmax.f32 %v478, 0.0
  %v485 = vld [vmem:[%s7] sm:$0xff]
  %v486 = vld [vmem:[%s7 + $0x8] sm:$0xff]
  %v487 = vld [vmem:[%s8] sm:$0x1]
  %v489 = vlaneseq
  %v490 = vshrl.u32 %v489, 7
  %v491 = vsub.s32 0, %v490
  %v492 = vrot.slane %v487, %v491
  %494 = vxpose.xlu0.b32.start [1/16] %v481, 128
  %495 = vxpose.xlu0.b32.cont [2/16] %v482, 128
  %496 = vxpose.xlu0.b32.cont [3/16] %v483, 128
  %497 = vxpose.xlu0.b32.cont [4/16] %v484, 128
  %498 = vxpose.xlu0.b32.cont [5/16] 0.0, 128
  %499 = vxpose.xlu0.b32.cont [6/16] 0.0, 128
  %500 = vxpose.xlu0.b32.cont [7/16] 0.0, 128
  %501 = vxpose.xlu0.b32.cont [8/16] 0.0, 128
  %502 = vxpose.xlu0.b32.cont [9/16] 0.0, 128
  %503 = vxpose.xlu0.b32.cont [10/16] 0.0, 128
  %504 = vxpose.xlu0.b32.cont [11/16] 0.0, 128
  %505 = vxpose.xlu0.b32.cont [12/16] 0.0, 128
  %506 = vxpose.xlu0.b32.cont [13/16] 0.0, 128
  %507 = vxpose.xlu0.b32.cont [14/16] 0.0, 128
  %508 = vxpose.xlu0.b32.cont [15/16] 0.0, 128
  %509 = vxpose.xlu0.b32.end [16/16] 0.0, 128
  %v510 = vpop.trf.xlu0
  %v511 = vpop.trf.xlu0
  %v512 = vpop.trf.xlu0
  %v513 = vpop.trf.xlu0
  %v514 = vpop.trf.xlu0
  %v515 = vpop.trf.xlu0
  %v516 = vpop.trf.xlu0
  %v517 = vpop.trf.xlu0
  %v518 = vpop.trf.xlu0
  %v519 = vpop.trf.xlu0
  %v520 = vpop.trf.xlu0
  %v521 = vpop.trf.xlu0
  %v522 = vpop.trf.xlu0
  %v523 = vpop.trf.xlu0
  %v524 = vpop.trf.xlu0
  %v525 = vpop.trf.xlu0
  %v527 = vsel %vm254, %v510, 0
  %v530 = vsel %vm254, %v511, 0
  %v533 = vsel %vm254, %v512, 0
  %v536 = vsel %vm254, %v513, 0
  %v539 = vsel %vm254, %v514, 0
  %v542 = vsel %vm254, %v515, 0
  %v545 = vsel %vm254, %v516, 0
  %v548 = vsel %vm254, %v517, 0
  %v551 = vsel %vm254, %v518, 0
  %v554 = vsel %vm254, %v519, 0
  %v557 = vsel %vm254, %v520, 0
  %v560 = vsel %vm254, %v521, 0
  %v563 = vsel %vm254, %v522, 0
  %v566 = vsel %vm254, %v523, 0
  %v569 = vsel %vm254, %v524, 0
  %v572 = vsel %vm254, %v525, 0
  %v575 = vsel %vm254, %v485, 0
  %v578 = vsel %vm254, %v486, 0
  %580 = vmatprep.subr.mxu0 0.0
  %581 = vmatpush1.xpose.msra.mxu0 %v575
  %582 = vmatprep.subr.mxu0 0.0
  %583 = vmatpush1.xpose.msra.mxu0 %v578
  %584 = vmatprep.subr.mxu0 0.0
  %585 = vmatpush1.xpose.msra.mxu0 0.0
  %586 = vmatprep.subr.mxu0 0.0
  %587 = vmatpush1.xpose.msra.mxu0 0.0
  %588 = vmatprep.subr.mxu0 0.0
  %589 = vmatpush1.xpose.msra.mxu0 0.0
  %590 = vmatprep.subr.mxu0 0.0
  %591 = vmatpush1.xpose.msra.mxu0 0.0
  %592 = vmatprep.subr.mxu0 0.0
  %593 = vmatpush1.xpose.msra.mxu0 0.0
  %594 = vmatprep.subr.mxu0 0.0
  %595 = vmatpush1.xpose.msra.mxu0 0.0
  %596 = vmatprep.subr.mxu0 0.0
  %597 = vmatpush1.xpose.msra.mxu0 0.0
  %598 = vmatprep.subr.mxu0 0.0
  %599 = vmatpush1.xpose.msra.mxu0 0.0
  %600 = vmatprep.subr.mxu0 0.0
  %601 = vmatpush1.xpose.msra.mxu0 0.0
  %602 = vmatprep.subr.mxu0 0.0
  %603 = vmatpush1.xpose.msra.mxu0 0.0
  %604 = vmatprep.subr.mxu0 0.0
  %605 = vmatpush1.xpose.msra.mxu0 0.0
  %606 = vmatprep.subr.mxu0 0.0
  %607 = vmatpush1.xpose.msra.mxu0 0.0
  %608 = vmatprep.subr.mxu0 0.0
  %609 = vmatpush1.xpose.msra.mxu0 0.0
  %610 = vmatprep.subr.mxu0 0.0
  %611 = vmatpush1.xpose.msra.mxu0 0.0
  %612 = vmatprep.subr.mxu0 0.0
  %613 = vmatpush1.xpose.msra.mxu0 0.0
  %614 = vmatprep.subr.mxu0 0.0
  %615 = vmatpush1.xpose.msra.mxu0 0.0
  %616 = vmatprep.subr.mxu0 0.0
  %617 = vmatpush1.xpose.msra.mxu0 0.0
  %618 = vmatprep.subr.mxu0 0.0
  %619 = vmatpush1.xpose.msra.mxu0 0.0
  %620 = vmatprep.subr.mxu0 0.0
  %621 = vmatpush1.xpose.msra.mxu0 0.0
  %622 = vmatprep.subr.mxu0 0.0
  %623 = vmatpush1.xpose.msra.mxu0 0.0
  %624 = vmatprep.subr.mxu0 0.0
  %625 = vmatpush1.xpose.msra.mxu0 0.0
  %626 = vmatprep.subr.mxu0 0.0
  %627 = vmatpush1.xpose.msra.mxu0 0.0
  %628 = vmatprep.subr.mxu0 0.0
  %629 = vmatpush1.xpose.msra.mxu0 0.0
  %630 = vmatprep.subr.mxu0 0.0
  %631 = vmatpush1.xpose.msra.mxu0 0.0
  %632 = vmatprep.subr.mxu0 0.0
  %633 = vmatpush1.xpose.msra.mxu0 0.0
  %634 = vmatprep.subr.mxu0 0.0
  %635 = vmatpush1.xpose.msra.mxu0 0.0
  %636 = vmatprep.subr.mxu0 0.0
  %637 = vmatpush1.xpose.msra.mxu0 0.0
  %638 = vmatprep.subr.mxu0 0.0
  %639 = vmatpush1.xpose.msra.mxu0 0.0
  %640 = vmatprep.subr.mxu0 0.0
  %641 = vmatpush1.xpose.msra.mxu0 0.0
  %642 = vmatprep.subr.mxu0 0.0
  %643 = vmatpush1.xpose.msra.mxu0 0.0
  %644 = vmatprep.mubr.f32.mxu0 0.0
  %645 = vmatmul.mubr.f32.gmra.mrb[0].mxu0 %v527
  %v646 = vpop.f32.mrb[0].mxu0
  %v647 = vadd.f32 %v492, %v646
  %v648 = vpop.f32.mrb[0].mxu0
  %649 = vmatprep.mubr.f32.mxu0 0.0
  %650 = vmatmul.mubr.f32.gmra.mrb[0].mxu0 %v530
  %v651 = vpop.f32.mrb[0].mxu0
  %v652 = vadd.f32 %v492, %v651
  %v653 = vpop.f32.mrb[0].mxu0
  %654 = vmatprep.mubr.f32.mxu0 0.0
  %655 = vmatmul.mubr.f32.gmra.mrb[0].mxu0 %v533
  %v656 = vpop.f32.mrb[0].mxu0
  %v657 = vadd.f32 %v492, %v656
  %v658 = vpop.f32.mrb[0].mxu0
  %659 = vmatprep.mubr.f32.mxu0 0.0
  %660 = vmatmul.mubr.f32.gmra.mrb[0].mxu0 %v536
  %v661 = vpop.f32.mrb[0].mxu0
  %v662 = vadd.f32 %v492, %v661
  %v663 = vpop.f32.mrb[0].mxu0
  %664 = vmatprep.mubr.f32.mxu0 0.0
  %665 = vmatmul.mubr.f32.gmra.mrb[0].mxu0 %v539
  %v666 = vpop.f32.mrb[0].mxu0
  %v667 = vadd.f32 %v492, %v666
  %v668 = vpop.f32.mrb[0].mxu0
  %669 = vmatprep.mubr.f32.mxu0 0.0
  %670 = vmatmul.mubr.f32.gmra.mrb[0].mxu0 %v542
  %v671 = vpop.f32.mrb[0].mxu0
  %v672 = vadd.f32 %v492, %v671
  %v673 = vpop.f32.mrb[0].mxu0
  %674 = vmatprep.mubr.f32.mxu0 0.0
  %675 = vmatmul.mubr.f32.gmra.mrb[0].mxu0 %v545
  %v676 = vpop.f32.mrb[0].mxu0
  %v677 = vadd.f32 %v492, %v676
  %v678 = vpop.f32.mrb[0].mxu0
  %679 = vmatprep.mubr.f32.mxu0 0.0
  %680 = vmatmul.mubr.f32.gmra.mrb[0].mxu0 %v548
  %v681 = vpop.f32.mrb[0].mxu0
  %v682 = vadd.f32 %v492, %v681
  %v683 = vpop.f32.mrb[0].mxu0
  %684 = vmatprep.mubr.f32.mxu0 0.0
  %685 = vmatmul.mubr.f32.gmra.mrb[0].mxu0 %v551
  %v686 = vpop.f32.mrb[0].mxu0
  %v687 = vadd.f32 %v492, %v686
  %v688 = vpop.f32.mrb[0].mxu0
  %689 = vmatprep.mubr.f32.mxu0 0.0
  %690 = vmatmul.mubr.f32.gmra.mrb[0].mxu0 %v554
  %v691 = vpop.f32.mrb[0].mxu0
  %v692 = vadd.f32 %v492, %v691
  %v693 = vpop.f32.mrb[0].mxu0
  %694 = vmatprep.mubr.f32.mxu0 0.0
  %695 = vmatmul.mubr.f32.gmra.mrb[0].mxu0 %v557
  %v696 = vpop.f32.mrb[0].mxu0
  %v697 = vadd.f32 %v492, %v696
  %v698 = vpop.f32.mrb[0].mxu0
  %699 = vmatprep.mubr.f32.mxu0 0.0
  %700 = vmatmul.mubr.f32.gmra.mrb[0].mxu0 %v560
  %v701 = vpop.f32.mrb[0].mxu0
  %v702 = vadd.f32 %v492, %v701
  %v703 = vpop.f32.mrb[0].mxu0
  %704 = vmatprep.mubr.f32.mxu0 0.0
  %705 = vmatmul.mubr.f32.gmra.mrb[0].mxu0 %v563
  %v706 = vpop.f32.mrb[0].mxu0
  %v707 = vadd.f32 %v492, %v706
  %v708 = vpop.f32.mrb[0].mxu0
  %709 = vmatprep.mubr.f32.mxu0 0.0
  %710 = vmatmul.mubr.f32.gmra.mrb[0].mxu0 %v566
  %v711 = vpop.f32.mrb[0].mxu0
  %v712 = vadd.f32 %v492, %v711
  %v713 = vpop.f32.mrb[0].mxu0
  %714 = vmatprep.mubr.f32.mxu0 0.0
  %715 = vmatmul.mubr.f32.gmra.mrb[0].mxu0 %v569
  %v716 = vpop.f32.mrb[0].mxu0
  %v717 = vadd.f32 %v492, %v716
  %v718 = vpop.f32.mrb[0].mxu0
  %719 = vmatprep.mubr.f32.mxu0 0.0
  %720 = vmatmul.mubr.f32.gmra.mrb[0].mxu0 %v572
  %v721 = vpop.f32.mrb[0].mxu0
  %v722 = vadd.f32 %v492, %v721
  %v723 = vpop.f32.mrb[0].mxu0
  %724 = vdwg.mxu0
  %vm725 = vcmask 130048
  %726 = vst.msk [vmem:[%s9] sm:$0xff] %vm725, %v647
  %727 = vst.msk [vmem:[%s9 + $0x8] sm:$0xff] %vm725, %v652
  %728 = vst.msk [vmem:[%s9 + $0x10] sm:$0xff] %vm725, %v657
  %729 = vst.msk [vmem:[%s9 + $0x18] sm:$0xff] %vm725, %v662
  %730 = vst.msk [vmem:[%s9 + $0x20] sm:$0xff] %vm725, %v667
  %731 = vst.msk [vmem:[%s9 + $0x28] sm:$0xff] %vm725, %v672
  %732 = vst.msk [vmem:[%s9 + $0x30] sm:$0xff] %vm725, %v677
  %733 = vst.msk [vmem:[%s9 + $0x38] sm:$0xff] %vm725, %v682
  %734 = vst.msk [vmem:[%s9 + $0x40] sm:$0xff] %vm725, %v687
  %735 = vst.msk [vmem:[%s9 + $0x48] sm:$0xff] %vm725, %v692
  %736 = vst.msk [vmem:[%s9 + $0x50] sm:$0xff] %vm725, %v697
  %737 = vst.msk [vmem:[%s9 + $0x58] sm:$0xff] %vm725, %v702
  %738 = vst.msk [vmem:[%s9 + $0x60] sm:$0xff] %vm725, %v707
  %739 = vst.msk [vmem:[%s9 + $0x68] sm:$0xff] %vm725, %v712
  %740 = vst.msk [vmem:[%s9 + $0x70] sm:$0xff] %vm725, %v717
  %741 = vst.msk [vmem:[%s9 + $0x78] sm:$0xff] %vm725, %v722
  // Predicated region
  $region38: #{tpu_custom_call.1} parent=0 // pred_check
    _
  $region39: #{tpu_custom_call.1} parent=0 // pred_check_branch
    %743 = sbr.rel (0) target = $region41
  $region40: #{tpu_custom_call.1} parent=0 // pred_region
    _
  $region41: #{tpu_custom_call.1} parent=0 // pred_fallthru
    _
  // Predicated region
  $region42: #{tpu_custom_call.1} parent=0 // pred_check
    _
  $region43: #{tpu_custom_call.1} parent=0 // pred_check_branch
    %745 = sbr.rel (0) target = $region45
  $region44: #{tpu_custom_call.1} parent=0 // pred_region
    _
  $region45: #{tpu_custom_call.1} parent=0 // pred_fallthru
    _

</llo_original>
